<compile_context>
chip_gen: v5e
topology: v5e:2x2
jax: 0.10.0
libtpu: 0.0.40
codegen_flags: <defaults>
</compile_context>

<pallas_src>
import jax
import jax.numpy as jnp
from jax import lax
from jax.experimental import pallas as pl
from jax.experimental.pallas import tpu as pltpu

LANE = 128      # TPU lane width
SUBLANE = 8     # TPU sublane width


# ---------------------------------------------------------------------------
# Fused kernel: both graphs' 2-layer GCN + mean readout + 3-layer MLP head.
# Per-graph operands (g in {1,2}):
#   adjg_ref : (Np, Np)  bf16  raw 0/1 (padded) adjacency, adj[i, j]=1 <=> edge j->i
#   xg_ref   : (Np, F)   bf16  node features
#   mwg_ref  : (1, Np)   f32   mean weights (1/N for valid rows, 0 for pad rows)
#   rdg_ref  : (Np, 1)   f32   rsqrt(clamped in-degree)   -> scales output rows (dst)
#   rsg_ref  : (Np, 1)   f32   rsqrt(clamped out-degree)  -> scales source feature rows
# Shared weights: GraphConv W (bf16) / b (f32) with hidden padded to 128 lanes;
# head weights (bf16) / biases (f32) with the 1-wide l3 output padded to 128 lanes.
#   o_ref    : (1, 128)  f32   lane-dense output slab; column 0 is the model output
# ---------------------------------------------------------------------------
def fused_gcn_kernel(adj1_ref, x1_ref, mw1_ref, rd1_ref, rs1_ref,
                     adj2_ref, x2_ref, mw2_ref, rd2_ref, rs2_ref,
                     w1_ref, b1_ref, w2_ref, b2_ref,
                     wl1_ref, bl1_ref, wl2_ref, bl2_ref, wl3_ref, bl3_ref,
                     o_ref):

    def gcn_readout(adj_ref, x_ref, mw_ref, rd_ref, rs_ref):
        adj = adj_ref[...]          # (Np, Np) bf16, exact {0,1}
        rd = rd_ref[...]            # (Np, 1)  f32  dst-side norm
        rs = rs_ref[...]            # (Np, 1)  f32  src-side norm

        # Layer 1: relu( rd * (A @ (rs * (X @ W1))) + b1 )
        xw = jnp.dot(x_ref[...], w1_ref[...], preferred_element_type=jnp.float32)
        xw = (rs * xw).astype(jnp.bfloat16)
        h1 = rd * jnp.dot(adj, xw, preferred_element_type=jnp.float32)
        f1 = jnp.maximum(h1 + b1_ref[...], 0.0)

        # Layer 2: relu( rd * (A @ (rs * (f1 @ W2))) + b2 )
        xw2 = jnp.dot(f1.astype(jnp.bfloat16), w2_ref[...],
                      preferred_element_type=jnp.float32)
        xw2 = (rs * xw2).astype(jnp.bfloat16)
        h2 = rd * jnp.dot(adj, xw2, preferred_element_type=jnp.float32)
        f2 = jnp.maximum(h2 + b2_ref[...], 0.0)

        # mean_nodes as a masked ones-row matmul (MXU); padded rows carry weight 0.
        return jnp.dot(mw_ref[...], f2, preferred_element_type=jnp.float32)   # (1, NHp)

    hg1 = gcn_readout(adj1_ref, x1_ref, mw1_ref, rd1_ref, rs1_ref)
    hg2 = gcn_readout(adj2_ref, x2_ref, mw2_ref, rd2_ref, rs2_ref)
    hg = hg1 * hg2

    # Readout head: l3(l2(l1(hg))) with no activations (matches the PyTorch forward).
    l1 = jnp.dot(hg.astype(jnp.bfloat16), wl1_ref[...],
                 preferred_element_type=jnp.float32) + bl1_ref[...]
    l2 = jnp.dot(l1.astype(jnp.bfloat16), wl2_ref[...],
                 preferred_element_type=jnp.float32) + bl2_ref[...]
    l3 = jnp.dot(l2.astype(jnp.bfloat16), wl3_ref[...],
                 preferred_element_type=jnp.float32) + bl3_ref[...]
    o_ref[...] = l3


# ---------------------------------------------------------------------------
# Wrapper glue: padding / dtype prep / degree precompute, then one pallas_call.
# ---------------------------------------------------------------------------
def _round_up(x, m):
    return ((x + m - 1) // m) * m


def _pad2(a, rows, cols):
    return jnp.pad(a, ((0, rows - a.shape[0]), (0, cols - a.shape[1])))


def _prepare_params(params, nfeat, nhid):
    """Zero-pad hidden dim to 128 lanes (inert padding) and cast matmul weights to bf16."""
    nh = _round_up(nhid, LANE)
    h1 = params["w_l1"].shape[1]
    return {
        "w_gc1": _pad2(params["w_gc1"], nfeat, nh).astype(jnp.bfloat16),
        "b_gc1": _pad2(params["b_gc1"], 1, nh).astype(jnp.float32),
        "w_gc2": _pad2(params["w_gc2"], nh, nh).astype(jnp.bfloat16),
        "b_gc2": _pad2(params["b_gc2"], 1, nh).astype(jnp.float32),
        "w_l1": _pad2(params["w_l1"], nh, h1).astype(jnp.bfloat16),
        "b_l1": params["b_l1"].astype(jnp.float32),
        "w_l2": params["w_l2"].astype(jnp.bfloat16),
        "b_l2": params["b_l2"].astype(jnp.float32),
        # pad the 1-wide output to 128 lanes (extra cols are zero; sliced off outside)
        "w_l3": _pad2(params["w_l3"], params["w_l3"].shape[0], LANE).astype(jnp.bfloat16),
        "b_l3": _pad2(params["b_l3"], 1, LANE).astype(jnp.float32),
    }


def _prepare_graph(adj, x):
    """Pad one graph to a sublane-multiple node count; precompute norms in exact f32."""
    n = adj.shape[0]
    n_pad = max(_round_up(n, SUBLANE), SUBLANE)
    adj_f32 = jnp.pad(adj.astype(jnp.float32), ((0, n_pad - n), (0, n_pad - n)))
    # DGL GraphConv norm='both': degrees clamped to >= 1 (padded rows/cols clamp to 1).
    rd = lax.rsqrt(jnp.maximum(jnp.sum(adj_f32, axis=1), 1.0)).reshape(n_pad, 1)  # dst (in-deg)
    rs = lax.rsqrt(jnp.maximum(jnp.sum(adj_f32, axis=0), 1.0)).reshape(n_pad, 1)  # src (out-deg)
    adj_bf16 = adj_f32.astype(jnp.bfloat16)          # exact: entries are {0, 1}
    x_p = jnp.pad(x, ((0, n_pad - n), (0, 0))).astype(jnp.bfloat16)
    # mean weights: 1/n for real nodes, 0 for padded rows (keeps mean_nodes exact)
    mw = ((jnp.arange(n_pad) < n).astype(jnp.float32) / float(n)).reshape(1, n_pad)
    return adj_bf16, x_p, mw, rd, rs


@jax.jit
def my_gcn_forward(adj1, x1, adj2, x2, params):
    # TODO(synk): DGL's sparse message passing / heterogeneous graph batching is
    # represented here as dense, zero-padded adjacency matmuls (dropout is unused
    # in the reference forward, so it is omitted).
    nfeat = x1.shape[1]
    nhid = params["w_gc1"].shape[1]

    a1, x1p, m1, rd1, rs1 = _prepare_graph(adj1, x1)
    a2, x2p, m2, rd2, rs2 = _prepare_graph(adj2, x2)
    p = _prepare_params(params, nfeat, nhid)

    operands = (a1, x1p, m1, rd1, rs1,
                a2, x2p, m2, rd2, rs2,
                p["w_gc1"], p["b_gc1"], p["w_gc2"], p["b_gc2"],
                p["w_l1"], p["b_l1"], p["w_l2"], p["b_l2"], p["w_l3"], p["b_l3"])

    # Scoped-VMEM limit sized from actual operand footprint (floor 32 MiB, cap 64 MiB
    # so the request stays valid on v7x's 64 MiB per-TC VMEM).
    op_bytes = sum(int(o.size) * o.dtype.itemsize for o in operands)
    vmem_limit = int(min(64 << 20, max(32 << 20, 2 * op_bytes + (1 << 20))))

    vmem = pl.BlockSpec(memory_space=pltpu.MemorySpace.VMEM)
    out_pad = pl.pallas_call(
        fused_gcn_kernel,
        out_shape=jax.ShapeDtypeStruct((1, LANE), jnp.float32),
        in_specs=[vmem] * len(operands),
        out_specs=vmem,
        compiler_params=pltpu.CompilerParams(vmem_limit_bytes=vmem_limit),
    )(*operands)

    return out_pad[:, :1]   # (1, 1) — only lane 0 of the padded slab is the model output


if __name__ == "__main__":
    # Small synthetic sizes consistent with the module.
    N1, N2 = 8, 8          # nodes per graph
    NFEAT, NHID = 16, 32   # nfeat, nhid
    H1, H2 = 512, 128      # fixed by the module (l1: nhid->512, l2: 512->128, l3: 128->1)

    key = jax.random.PRNGKey(0)
    ks = jax.random.split(key, 12)

    # Random symmetric adjacencies with self loops (avoids zero in-degree).
    def make_adj(k, n):
        a = (jax.random.uniform(k, (n, n)) > 0.6).astype(jnp.float32)
        a = jnp.maximum(a, a.T)
        return jnp.maximum(a, jnp.eye(n, dtype=jnp.float32))

    adj1 = make_adj(ks[0], N1)
    adj2 = make_adj(ks[1], N2)
    x1 = jax.random.normal(ks[2], (N1, NFEAT), jnp.float32)
    x2 = jax.random.normal(ks[3], (N2, NFEAT), jnp.float32)

    params = {
        "w_gc1": 0.1 * jax.random.normal(ks[4], (NFEAT, NHID), jnp.float32),
        "b_gc1": jnp.zeros((1, NHID), jnp.float32),
        "w_gc2": 0.1 * jax.random.normal(ks[5], (NHID, NHID), jnp.float32),
        "b_gc2": jnp.zeros((1, NHID), jnp.float32),
        "w_l1": 0.1 * jax.random.normal(ks[6], (NHID, H1), jnp.float32),
        "b_l1": 0.01 * jax.random.normal(ks[7], (1, H1), jnp.float32),
        "w_l2": 0.1 * jax.random.normal(ks[8], (H1, H2), jnp.float32),
        "b_l2": 0.01 * jax.random.normal(ks[9], (1, H2), jnp.float32),
        "w_l3": 0.1 * jax.random.normal(ks[10], (H2, 1), jnp.float32),
        "b_l3": 0.01 * jax.random.normal(ks[11], (1, 1), jnp.float32),
    }

    out = my_gcn_forward(adj1, x1, adj2, x2, params)
    jax.block_until_ready(out)
    assert out.shape == (1, 1)
    assert bool(jnp.isfinite(out).all())
    print("KERNEL_OK")
</pallas_src>

<mosaic_0001>
module attributes {stable_mosaic.version = 11 : i64} {
  func.func @fused_gcn_kernel(%arg0: memref<8x8xbf16, #tpu.memory_space<vmem>>, %arg1: memref<8x16xbf16, #tpu.memory_space<vmem>>, %arg2: memref<1x8xf32, #tpu.memory_space<vmem>>, %arg3: memref<8x1xf32, #tpu.memory_space<vmem>>, %arg4: memref<8x1xf32, #tpu.memory_space<vmem>>, %arg5: memref<8x8xbf16, #tpu.memory_space<vmem>>, %arg6: memref<8x16xbf16, #tpu.memory_space<vmem>>, %arg7: memref<1x8xf32, #tpu.memory_space<vmem>>, %arg8: memref<8x1xf32, #tpu.memory_space<vmem>>, %arg9: memref<8x1xf32, #tpu.memory_space<vmem>>, %arg10: memref<16x128xbf16, #tpu.memory_space<vmem>>, %arg11: memref<1x128xf32, #tpu.memory_space<vmem>>, %arg12: memref<128x128xbf16, #tpu.memory_space<vmem>>, %arg13: memref<1x128xf32, #tpu.memory_space<vmem>>, %arg14: memref<128x512xbf16, #tpu.memory_space<vmem>>, %arg15: memref<1x512xf32, #tpu.memory_space<vmem>>, %arg16: memref<512x128xbf16, #tpu.memory_space<vmem>>, %arg17: memref<1x128xf32, #tpu.memory_space<vmem>>, %arg18: memref<128x128xbf16, #tpu.memory_space<vmem>>, %arg19: memref<1x128xf32, #tpu.memory_space<vmem>>, %arg20: memref<1x128xf32, #tpu.memory_space<vmem>>) attributes {dimension_semantics = [], scalar_prefetch = 0 : i64, scratch_operands = 0 : i64, tpu.core_type = #tpu.core_type<tc>} {
    %c0 = arith.constant 0 : index
    %c0_0 = arith.constant 0 : index
    %0 = vector.load %arg0[%c0, %c0_0] : memref<8x8xbf16, #tpu.memory_space<vmem>>, vector<8x8xbf16>
    %c0_1 = arith.constant 0 : index
    %c0_2 = arith.constant 0 : index
    %1 = vector.load %arg3[%c0_1, %c0_2] : memref<8x1xf32, #tpu.memory_space<vmem>>, vector<8x1xf32>
    %c0_3 = arith.constant 0 : index
    %c0_4 = arith.constant 0 : index
    %2 = vector.load %arg4[%c0_3, %c0_4] : memref<8x1xf32, #tpu.memory_space<vmem>>, vector<8x1xf32>
    %c0_5 = arith.constant 0 : index
    %c0_6 = arith.constant 0 : index
    %3 = vector.load %arg1[%c0_5, %c0_6] : memref<8x16xbf16, #tpu.memory_space<vmem>>, vector<8x16xbf16>
    %c0_7 = arith.constant 0 : index
    %c0_8 = arith.constant 0 : index
    %4 = vector.load %arg10[%c0_7, %c0_8] : memref<16x128xbf16, #tpu.memory_space<vmem>>, vector<16x128xbf16>
    %cst = arith.constant dense<0.000000e+00> : vector<8x128xf32>
    %5 = tpu.matmul %3, %4, %cst {dimension_numbers = #tpu.dot_dimension_numbers<[1], [0], [0], [1], [0, 0, 1, 1], [], []>} : vector<8x16xbf16>, vector<16x128xbf16>, vector<8x128xf32> -> vector<8x128xf32>
    %6 = vector.broadcast %2 : vector<8x1xf32> to vector<8x128xf32>
    %7 = arith.mulf %6, %5 : vector<8x128xf32>
    %8 = arith.truncf %7 : vector<8x128xf32> to vector<8x128xbf16>
    %cst_9 = arith.constant dense<0.000000e+00> : vector<8x128xf32>
    %9 = tpu.matmul %0, %8, %cst_9 {dimension_numbers = #tpu.dot_dimension_numbers<[1], [0], [0], [1], [0, 0, 1, 1], [], []>} : vector<8x8xbf16>, vector<8x128xbf16>, vector<8x128xf32> -> vector<8x128xf32>
    %10 = vector.broadcast %1 : vector<8x1xf32> to vector<8x128xf32>
    %11 = arith.mulf %10, %9 : vector<8x128xf32>
    %c0_10 = arith.constant 0 : index
    %c0_11 = arith.constant 0 : index
    %12 = vector.load %arg11[%c0_10, %c0_11] : memref<1x128xf32, #tpu.memory_space<vmem>>, vector<1x128xf32>
    %13 = vector.broadcast %12 : vector<1x128xf32> to vector<8x128xf32>
    %14 = arith.addf %11, %13 : vector<8x128xf32>
    %cst_12 = arith.constant 0.000000e+00 : f32
    %15 = vector.broadcast %cst_12 : f32 to vector<8x128xf32>
    %16 = arith.maximumf %14, %15 : vector<8x128xf32>
    %17 = arith.truncf %16 : vector<8x128xf32> to vector<8x128xbf16>
    %c0_13 = arith.constant 0 : index
    %c0_14 = arith.constant 0 : index
    %18 = vector.load %arg12[%c0_13, %c0_14] : memref<128x128xbf16, #tpu.memory_space<vmem>>, vector<128x128xbf16>
    %cst_15 = arith.constant dense<0.000000e+00> : vector<8x128xf32>
    %19 = tpu.matmul %17, %18, %cst_15 {dimension_numbers = #tpu.dot_dimension_numbers<[1], [0], [0], [1], [0, 0, 1, 1], [], []>} : vector<8x128xbf16>, vector<128x128xbf16>, vector<8x128xf32> -> vector<8x128xf32>
    %20 = vector.broadcast %2 : vector<8x1xf32> to vector<8x128xf32>
    %21 = arith.mulf %20, %19 : vector<8x128xf32>
    %22 = arith.truncf %21 : vector<8x128xf32> to vector<8x128xbf16>
    %cst_16 = arith.constant dense<0.000000e+00> : vector<8x128xf32>
    %23 = tpu.matmul %0, %22, %cst_16 {dimension_numbers = #tpu.dot_dimension_numbers<[1], [0], [0], [1], [0, 0, 1, 1], [], []>} : vector<8x8xbf16>, vector<8x128xbf16>, vector<8x128xf32> -> vector<8x128xf32>
    %24 = vector.broadcast %1 : vector<8x1xf32> to vector<8x128xf32>
    %25 = arith.mulf %24, %23 : vector<8x128xf32>
    %c0_17 = arith.constant 0 : index
    %c0_18 = arith.constant 0 : index
    %26 = vector.load %arg13[%c0_17, %c0_18] : memref<1x128xf32, #tpu.memory_space<vmem>>, vector<1x128xf32>
    %27 = vector.broadcast %26 : vector<1x128xf32> to vector<8x128xf32>
    %28 = arith.addf %25, %27 : vector<8x128xf32>
    %cst_19 = arith.constant 0.000000e+00 : f32
    %29 = vector.broadcast %cst_19 : f32 to vector<8x128xf32>
    %30 = arith.maximumf %28, %29 : vector<8x128xf32>
    %c0_20 = arith.constant 0 : index
    %c0_21 = arith.constant 0 : index
    %31 = vector.load %arg2[%c0_20, %c0_21] : memref<1x8xf32, #tpu.memory_space<vmem>>, vector<1x8xf32>
    %cst_22 = arith.constant dense<0.000000e+00> : vector<1x128xf32>
    %32 = tpu.matmul %31, %30, %cst_22 {dimension_numbers = #tpu.dot_dimension_numbers<[1], [0], [0], [1], [0, 0, 1, 1], [], []>} : vector<1x8xf32>, vector<8x128xf32>, vector<1x128xf32> -> vector<1x128xf32>
    %c0_23 = arith.constant 0 : index
    %c0_24 = arith.constant 0 : index
    %33 = vector.load %arg5[%c0_23, %c0_24] : memref<8x8xbf16, #tpu.memory_space<vmem>>, vector<8x8xbf16>
    %c0_25 = arith.constant 0 : index
    %c0_26 = arith.constant 0 : index
    %34 = vector.load %arg8[%c0_25, %c0_26] : memref<8x1xf32, #tpu.memory_space<vmem>>, vector<8x1xf32>
    %c0_27 = arith.constant 0 : index
    %c0_28 = arith.constant 0 : index
    %35 = vector.load %arg9[%c0_27, %c0_28] : memref<8x1xf32, #tpu.memory_space<vmem>>, vector<8x1xf32>
    %c0_29 = arith.constant 0 : index
    %c0_30 = arith.constant 0 : index
    %36 = vector.load %arg6[%c0_29, %c0_30] : memref<8x16xbf16, #tpu.memory_space<vmem>>, vector<8x16xbf16>
    %c0_31 = arith.constant 0 : index
    %c0_32 = arith.constant 0 : index
    %37 = vector.load %arg10[%c0_31, %c0_32] : memref<16x128xbf16, #tpu.memory_space<vmem>>, vector<16x128xbf16>
    %cst_33 = arith.constant dense<0.000000e+00> : vector<8x128xf32>
    %38 = tpu.matmul %36, %37, %cst_33 {dimension_numbers = #tpu.dot_dimension_numbers<[1], [0], [0], [1], [0, 0, 1, 1], [], []>} : vector<8x16xbf16>, vector<16x128xbf16>, vector<8x128xf32> -> vector<8x128xf32>
    %39 = vector.broadcast %35 : vector<8x1xf32> to vector<8x128xf32>
    %40 = arith.mulf %39, %38 : vector<8x128xf32>
    %41 = arith.truncf %40 : vector<8x128xf32> to vector<8x128xbf16>
    %cst_34 = arith.constant dense<0.000000e+00> : vector<8x128xf32>
    %42 = tpu.matmul %33, %41, %cst_34 {dimension_numbers = #tpu.dot_dimension_numbers<[1], [0], [0], [1], [0, 0, 1, 1], [], []>} : vector<8x8xbf16>, vector<8x128xbf16>, vector<8x128xf32> -> vector<8x128xf32>
    %43 = vector.broadcast %34 : vector<8x1xf32> to vector<8x128xf32>
    %44 = arith.mulf %43, %42 : vector<8x128xf32>
    %c0_35 = arith.constant 0 : index
    %c0_36 = arith.constant 0 : index
    %45 = vector.load %arg11[%c0_35, %c0_36] : memref<1x128xf32, #tpu.memory_space<vmem>>, vector<1x128xf32>
    %46 = vector.broadcast %45 : vector<1x128xf32> to vector<8x128xf32>
    %47 = arith.addf %44, %46 : vector<8x128xf32>
    %cst_37 = arith.constant 0.000000e+00 : f32
    %48 = vector.broadcast %cst_37 : f32 to vector<8x128xf32>
    %49 = arith.maximumf %47, %48 : vector<8x128xf32>
    %50 = arith.truncf %49 : vector<8x128xf32> to vector<8x128xbf16>
    %c0_38 = arith.constant 0 : index
    %c0_39 = arith.constant 0 : index
    %51 = vector.load %arg12[%c0_38, %c0_39] : memref<128x128xbf16, #tpu.memory_space<vmem>>, vector<128x128xbf16>
    %cst_40 = arith.constant dense<0.000000e+00> : vector<8x128xf32>
    %52 = tpu.matmul %50, %51, %cst_40 {dimension_numbers = #tpu.dot_dimension_numbers<[1], [0], [0], [1], [0, 0, 1, 1], [], []>} : vector<8x128xbf16>, vector<128x128xbf16>, vector<8x128xf32> -> vector<8x128xf32>
    %53 = vector.broadcast %35 : vector<8x1xf32> to vector<8x128xf32>
    %54 = arith.mulf %53, %52 : vector<8x128xf32>
    %55 = arith.truncf %54 : vector<8x128xf32> to vector<8x128xbf16>
    %cst_41 = arith.constant dense<0.000000e+00> : vector<8x128xf32>
    %56 = tpu.matmul %33, %55, %cst_41 {dimension_numbers = #tpu.dot_dimension_numbers<[1], [0], [0], [1], [0, 0, 1, 1], [], []>} : vector<8x8xbf16>, vector<8x128xbf16>, vector<8x128xf32> -> vector<8x128xf32>
    %57 = vector.broadcast %34 : vector<8x1xf32> to vector<8x128xf32>
    %58 = arith.mulf %57, %56 : vector<8x128xf32>
    %c0_42 = arith.constant 0 : index
    %c0_43 = arith.constant 0 : index
    %59 = vector.load %arg13[%c0_42, %c0_43] : memref<1x128xf32, #tpu.memory_space<vmem>>, vector<1x128xf32>
    %60 = vector.broadcast %59 : vector<1x128xf32> to vector<8x128xf32>
    %61 = arith.addf %58, %60 : vector<8x128xf32>
    %cst_44 = arith.constant 0.000000e+00 : f32
    %62 = vector.broadcast %cst_44 : f32 to vector<8x128xf32>
    %63 = arith.maximumf %61, %62 : vector<8x128xf32>
    %c0_45 = arith.constant 0 : index
    %c0_46 = arith.constant 0 : index
    %64 = vector.load %arg7[%c0_45, %c0_46] : memref<1x8xf32, #tpu.memory_space<vmem>>, vector<1x8xf32>
    %cst_47 = arith.constant dense<0.000000e+00> : vector<1x128xf32>
    %65 = tpu.matmul %64, %63, %cst_47 {dimension_numbers = #tpu.dot_dimension_numbers<[1], [0], [0], [1], [0, 0, 1, 1], [], []>} : vector<1x8xf32>, vector<8x128xf32>, vector<1x128xf32> -> vector<1x128xf32>
    %66 = arith.mulf %32, %65 : vector<1x128xf32>
    %67 = arith.truncf %66 : vector<1x128xf32> to vector<1x128xbf16>
    %c0_48 = arith.constant 0 : index
    %c0_49 = arith.constant 0 : index
    %68 = vector.load %arg14[%c0_48, %c0_49] : memref<128x512xbf16, #tpu.memory_space<vmem>>, vector<128x512xbf16>
    %cst_50 = arith.constant dense<0.000000e+00> : vector<1x512xf32>
    %69 = tpu.matmul %67, %68, %cst_50 {dimension_numbers = #tpu.dot_dimension_numbers<[1], [0], [0], [1], [0, 0, 1, 1], [], []>} : vector<1x128xbf16>, vector<128x512xbf16>, vector<1x512xf32> -> vector<1x512xf32>
    %c0_51 = arith.constant 0 : index
    %c0_52 = arith.constant 0 : index
    %70 = vector.load %arg15[%c0_51, %c0_52] : memref<1x512xf32, #tpu.memory_space<vmem>>, vector<1x512xf32>
    %71 = arith.addf %69, %70 : vector<1x512xf32>
    %72 = arith.truncf %71 : vector<1x512xf32> to vector<1x512xbf16>
    %c0_53 = arith.constant 0 : index
    %c0_54 = arith.constant 0 : index
    %73 = vector.load %arg16[%c0_53, %c0_54] : memref<512x128xbf16, #tpu.memory_space<vmem>>, vector<512x128xbf16>
    %cst_55 = arith.constant dense<0.000000e+00> : vector<1x128xf32>
    %74 = tpu.matmul %72, %73, %cst_55 {dimension_numbers = #tpu.dot_dimension_numbers<[1], [0], [0], [1], [0, 0, 1, 1], [], []>} : vector<1x512xbf16>, vector<512x128xbf16>, vector<1x128xf32> -> vector<1x128xf32>
    %c0_56 = arith.constant 0 : index
    %c0_57 = arith.constant 0 : index
    %75 = vector.load %arg17[%c0_56, %c0_57] : memref<1x128xf32, #tpu.memory_space<vmem>>, vector<1x128xf32>
    %76 = arith.addf %74, %75 : vector<1x128xf32>
    %77 = arith.truncf %76 : vector<1x128xf32> to vector<1x128xbf16>
    %c0_58 = arith.constant 0 : index
    %c0_59 = arith.constant 0 : index
    %78 = vector.load %arg18[%c0_58, %c0_59] : memref<128x128xbf16, #tpu.memory_space<vmem>>, vector<128x128xbf16>
    %cst_60 = arith.constant dense<0.000000e+00> : vector<1x128xf32>
    %79 = tpu.matmul %77, %78, %cst_60 {dimension_numbers = #tpu.dot_dimension_numbers<[1], [0], [0], [1], [0, 0, 1, 1], [], []>} : vector<1x128xbf16>, vector<128x128xbf16>, vector<1x128xf32> -> vector<1x128xf32>
    %c0_61 = arith.constant 0 : index
    %c0_62 = arith.constant 0 : index
    %80 = vector.load %arg19[%c0_61, %c0_62] : memref<1x128xf32, #tpu.memory_space<vmem>>, vector<1x128xf32>
    %81 = arith.addf %79, %80 : vector<1x128xf32>
    %c0_63 = arith.constant 0 : index
    %c0_64 = arith.constant 0 : index
    %82 = vector.load %arg20[%c0_63, %c0_64] : memref<1x128xf32, #tpu.memory_space<vmem>>, vector<1x128xf32>
    tpu.vector_store %arg20[%c0_63, %c0_64], %81 {strides = array<i32>} : memref<1x128xf32, #tpu.memory_space<vmem>>, vector<1x128xf32>,
    return
  }
}

</mosaic_0001>

<llo_original>
// kernel: my_gcn_forward.1
$region0: #{my_gcn_forward.1}
  #allocation0 [shape = 'u32[]', space=smem, size = 0x4, offset = 0x4, fixed_abs, tag = 'smem constant byte address 0x4 - core index']
  #allocation1 [shape = 'u32[72,128]{1,0:T(1,128)}', space=vmem, size = 0x9000, scoped, tag = 'internal scratch']
  %s0 = inlined_call_operand.vmem [shape: bf16[8,8], index: 0, kind: input, shape index: {}]
  %s1 = inlined_call_operand.vmem [shape: bf16[8,16], index: 1, kind: input, shape index: {}]
  %s2 = inlined_call_operand.vmem [shape: f32[1,8], index: 2, kind: input, shape index: {}, may-alias: {2,7}]
  %s3 = inlined_call_operand.vmem [shape: f32[8,1], index: 3, kind: input, shape index: {}]
  %s4 = inlined_call_operand.vmem [shape: f32[8,1], index: 4, kind: input, shape index: {}]
  %s5 = inlined_call_operand.vmem [shape: bf16[8,8], index: 5, kind: input, shape index: {}]
  %s6 = inlined_call_operand.vmem [shape: bf16[8,16], index: 6, kind: input, shape index: {}]
  %s7 = inlined_call_operand.vmem [shape: f32[1,8], index: 7, kind: input, shape index: {}, may-alias: {2,7}]
  %s8 = inlined_call_operand.vmem [shape: f32[8,1], index: 8, kind: input, shape index: {}]
  %s9 = inlined_call_operand.vmem [shape: f32[8,1], index: 9, kind: input, shape index: {}]
  %s10 = inlined_call_operand.vmem [shape: bf16[16,128], index: 10, kind: input, shape index: {}]
  %s11 = inlined_call_operand.vmem [shape: f32[1,128], index: 11, kind: input, shape index: {}]
  %s12 = inlined_call_operand.vmem [shape: bf16[128,128], index: 12, kind: input, shape index: {}]
  %s13 = inlined_call_operand.vmem [shape: f32[1,128], index: 13, kind: input, shape index: {}]
  %s14 = inlined_call_operand.vmem [shape: bf16[128,512], index: 14, kind: input, shape index: {}]
  %s15 = inlined_call_operand.vmem [shape: f32[1,512], index: 15, kind: input, shape index: {}]
  %s16 = inlined_call_operand.vmem [shape: bf16[512,128], index: 16, kind: input, shape index: {}]
  %s17 = inlined_call_operand.vmem [shape: f32[1,128], index: 17, kind: input, shape index: {}]
  %s18 = inlined_call_operand.vmem [shape: bf16[128,128], index: 18, kind: input, shape index: {}]
  %s19 = inlined_call_operand.vmem [shape: f32[1,128], index: 19, kind: input, shape index: {}]
  %s20 = inlined_call_operand.hbm [shape: f32[1,128], index: 20, kind: output, shape index: {}]
  %s21 = sld [smem:[#allocation0]]
  $region90: #{my_gcn_forward.1} parent=0
    _
  %s23 = ssub.s32 1, %s21
  %s24 = scalar_select 0, %s23, %s21
  $region1: #{my_gcn_forward.1} parent=0
    #allocation2 [shape = 'u8[512]{0}', space=vmem, size = 0x400, scoped, tag = 'output window, operand 0, single buffered']
    #allocation3 [shape = 's32[1]{0}', space=sflag, size = 0x4, scoped, tag = 'scoped memory for my_gcn_forward.1']
    %25 = vsyncpa [#allocation3], 0
    // Predicated region
    $region2: #{my_gcn_forward.1} parent=1 // pred_check
      _
    $region3: #{my_gcn_forward.1} parent=1 // pred_check_branch
      %27 = sbr.rel (0) target = $region5
    $region4: #{my_gcn_forward.1} parent=1 // pred_region
      _
    $region5: #{my_gcn_forward.1} parent=1 // pred_fallthru
      _
    // Predicated region
    $region6: #{my_gcn_forward.1} parent=1 // pred_check
      _
    $region7: #{my_gcn_forward.1} parent=1 // pred_check_branch
      %29 = sbr.rel (0) target = $region9
    $region8: #{my_gcn_forward.1} parent=1 // pred_region
      _
    $region9: #{my_gcn_forward.1} parent=1 // pred_fallthru
      _
    // Predicated region
    $region10: #{my_gcn_forward.1} parent=1 // pred_check
      _
    $region11: #{my_gcn_forward.1} parent=1 // pred_check_branch
      %31 = sbr.rel (0) target = $region13
    $region12: #{my_gcn_forward.1} parent=1 // pred_region
      _
    $region13: #{my_gcn_forward.1} parent=1 // pred_fallthru
      _
    // Predicated region
    $region14: #{my_gcn_forward.1} parent=1 // pred_check
      _
    $region15: #{my_gcn_forward.1} parent=1 // pred_check_branch
      %33 = sbr.rel (0) target = $region17
    $region16: #{my_gcn_forward.1} parent=1 // pred_region
      _
    $region17: #{my_gcn_forward.1} parent=1 // pred_fallthru
      _
    // Predicated region
    $region18: #{my_gcn_forward.1} parent=1 // pred_check
      _
    $region19: #{my_gcn_forward.1} parent=1 // pred_check_branch
      %35 = sbr.rel (0) target = $region21
    $region20: #{my_gcn_forward.1} parent=1 // pred_region
      _
    $region21: #{my_gcn_forward.1} parent=1 // pred_fallthru
      _
    // Predicated region
    $region22: #{my_gcn_forward.1} parent=1 // pred_check
      _
    $region23: #{my_gcn_forward.1} parent=1 // pred_check_branch
      %37 = sbr.rel (0) target = $region25
    $region24: #{my_gcn_forward.1} parent=1 // pred_region
      _
    $region25: #{my_gcn_forward.1} parent=1 // pred_fallthru
      _
    // Predicated region
    $region26: #{my_gcn_forward.1} parent=1 // pred_check
      _
    $region27: #{my_gcn_forward.1} parent=1 // pred_check_branch
      %39 = sbr.rel (0) target = $region29
    $region28: #{my_gcn_forward.1} parent=1 // pred_region
      _
    $region29: #{my_gcn_forward.1} parent=1 // pred_fallthru
      _
    // Predicated region
    $region30: #{my_gcn_forward.1} parent=1 // pred_check
      _
    $region31: #{my_gcn_forward.1} parent=1 // pred_check_branch
      %41 = sbr.rel (0) target = $region33
    $region32: #{my_gcn_forward.1} parent=1 // pred_region
      _
    $region33: #{my_gcn_forward.1} parent=1 // pred_fallthru
      _
    // Predicated region
    $region34: #{my_gcn_forward.1} parent=1 // pred_check
      _
    $region35: #{my_gcn_forward.1} parent=1 // pred_check_branch
      %43 = sbr.rel (0) target = $region37
    $region36: #{my_gcn_forward.1} parent=1 // pred_region
      _
    $region37: #{my_gcn_forward.1} parent=1 // pred_fallthru
      _
    // Predicated region
    $region38: #{my_gcn_forward.1} parent=1 // pred_check
      _
    $region39: #{my_gcn_forward.1} parent=1 // pred_check_branch
      %45 = sbr.rel (0) target = $region41
    $region40: #{my_gcn_forward.1} parent=1 // pred_region
      _
    $region41: #{my_gcn_forward.1} parent=1 // pred_fallthru
      _
    // Predicated region
    $region42: #{my_gcn_forward.1} parent=1 // pred_check
      _
    $region43: #{my_gcn_forward.1} parent=1 // pred_check_branch
      %47 = sbr.rel (0) target = $region45
    $region44: #{my_gcn_forward.1} parent=1 // pred_region
      _
    $region45: #{my_gcn_forward.1} parent=1 // pred_fallthru
      _
    // Predicated region
    $region46: #{my_gcn_forward.1} parent=1 // pred_check
      _
    $region47: #{my_gcn_forward.1} parent=1 // pred_check_branch
      %49 = sbr.rel (0) target = $region49
    $region48: #{my_gcn_forward.1} parent=1 // pred_region
      _
    $region49: #{my_gcn_forward.1} parent=1 // pred_fallthru
      _
    // Predicated region
    $region50: #{my_gcn_forward.1} parent=1 // pred_check
      _
    $region51: #{my_gcn_forward.1} parent=1 // pred_check_branch
      %51 = sbr.rel (0) target = $region53
    $region52: #{my_gcn_forward.1} parent=1 // pred_region
      _
    $region53: #{my_gcn_forward.1} parent=1 // pred_fallthru
      _
    // Predicated region
    $region54: #{my_gcn_forward.1} parent=1 // pred_check
      _
    $region55: #{my_gcn_forward.1} parent=1 // pred_check_branch
      %53 = sbr.rel (0) target = $region57
    $region56: #{my_gcn_forward.1} parent=1 // pred_region
      _
    $region57: #{my_gcn_forward.1} parent=1 // pred_fallthru
      _
    // Predicated region
    $region58: #{my_gcn_forward.1} parent=1 // pred_check
      _
    $region59: #{my_gcn_forward.1} parent=1 // pred_check_branch
      %55 = sbr.rel (0) target = $region61
    $region60: #{my_gcn_forward.1} parent=1 // pred_region
      _
    $region61: #{my_gcn_forward.1} parent=1 // pred_fallthru
      _
    // Predicated region
    $region62: #{my_gcn_forward.1} parent=1 // pred_check
      _
    $region63: #{my_gcn_forward.1} parent=1 // pred_check_branch
      %57 = sbr.rel (0) target = $region65
    $region64: #{my_gcn_forward.1} parent=1 // pred_region
      _
    $region65: #{my_gcn_forward.1} parent=1 // pred_fallthru
      _
    // Predicated region
    $region66: #{my_gcn_forward.1} parent=1 // pred_check
      _
    $region67: #{my_gcn_forward.1} parent=1 // pred_check_branch
      %59 = sbr.rel (0) target = $region69
    $region68: #{my_gcn_forward.1} parent=1 // pred_region
      _
    $region69: #{my_gcn_forward.1} parent=1 // pred_fallthru
      _
    // Predicated region
    $region70: #{my_gcn_forward.1} parent=1 // pred_check
      _
    $region71: #{my_gcn_forward.1} parent=1 // pred_check_branch
      %61 = sbr.rel (0) target = $region73
    $region72: #{my_gcn_forward.1} parent=1 // pred_region
      _
    $region73: #{my_gcn_forward.1} parent=1 // pred_fallthru
      _
    // Predicated region
    $region74: #{my_gcn_forward.1} parent=1 // pred_check
      _
    $region75: #{my_gcn_forward.1} parent=1 // pred_check_branch
      %63 = sbr.rel (0) target = $region77
    $region76: #{my_gcn_forward.1} parent=1 // pred_region
      _
    $region77: #{my_gcn_forward.1} parent=1 // pred_fallthru
      _
    // Predicated region
    $region78: #{my_gcn_forward.1} parent=1 // pred_check
      _
    $region79: #{my_gcn_forward.1} parent=1 // pred_check_branch
      %65 = sbr.rel (0) target = $region81
    $region80: #{my_gcn_forward.1} parent=1 // pred_region
      _
    $region81: #{my_gcn_forward.1} parent=1 // pred_fallthru
      _
    %v67 = vld [vmem:[%s0] sm:$0xf]
    %v68 = vld [vmem:[%s3] sm:$0xff]
    %v69 = vld [vmem:[%s4] sm:$0xff]
    %v70 = vld [vmem:[%s1] sm:$0xf]
    %v71 = vld [vmem:[%s10] sm:$0xf]
    %v72 = vld [vmem:[%s10 + $0x4] sm:$0xf]
    %v75 = vunpack.c.l.b16 %v71
    %v76 = vunpack.c.l.b16 %v72
    %v77 = vpack.c.b16 %v76, %v75
    %vm79 = vcmask 130048
    %v81 = vsel %vm79, %v70, 0
    %83 = vmatpush.bf16.msra.mxu0 0
    %84 = vmatpush.bf16.msra.mxu0 0
    %85 = vmatpush.bf16.msra.mxu0 0
    %86 = vmatpush.bf16.msra.mxu0 0
    %87 = vmatpush.bf16.msra.mxu0 0
    %88 = vmatpush.bf16.msra.mxu0 0
    %89 = vmatpush.bf16.msra.mxu0 0
    %90 = vmatpush.bf16.msra.mxu0 %v77
    %91 = vmatmul.bf16.gmra.mxu0 %v81
    %v92 = vpop.f32.mrf.mxu0
    %v93 = vadd.f32 0.0, %v92
    %v94 = vpop.f32.mrf.mxu0
    %95 = vdwg.mxu0
    %97 = vset.pattern.permute.xlu0 0
    %98 = vperm.xlu0 %97, %v69
    %v99 = vpop.permute.xlu0 %98
    %v101 = vmul.f32 %v99, %v93
    %v102 = vpack.c.bf16 %v101, %v101
    %vm103 = vcmask 64512
    %v105 = vsel %vm103, %v67, 0
    %vm107 = vcmask 1043456
    %v109 = vsel %vm107, %v102, 0
    %111 = vmatpush.bf16.msra.mxu0 0
    %112 = vmatpush.bf16.msra.mxu0 0
    %113 = vmatpush.bf16.msra.mxu0 0
    %114 = vmatpush.bf16.msra.mxu0 0
    %115 = vmatpush.bf16.msra.mxu0 0
    %116 = vmatpush.bf16.msra.mxu0 0
    %117 = vmatpush.bf16.msra.mxu0 0
    %118 = vmatpush.bf16.msra.mxu0 %v109
    %119 = vmatmul.bf16.gmra.mxu0 %v105
    %v120 = vpop.f32.mrf.mxu0
    %v121 = vadd.f32 0.0, %v120
    %v122 = vpop.f32.mrf.mxu0
    %123 = vdwg.mxu0
    %125 = vset.pattern.permute.xlu0 0
    %126 = vperm.xlu0 %125, %v68
    %v127 = vpop.permute.xlu0 %126
    %v129 = vmul.f32 %v127, %v121
    %v130 = vld [vmem:[%s11] sm:$0x1]
    %v132 = vperm.slane %v130, 0
    %v134 = vadd.f32 %v129, %v132
    %v135 = vmax.f32 %v134, 0.0
    %v136 = vpack.c.bf16 %v135, %v135
    %v137 = vld [vmem:[%s12] sm:$0xf]
    %v138 = vld [vmem:[%s12 + $0x4] sm:$0xf]
    %v139 = vld [vmem:[%s12 + $0x8] sm:$0xf]
    %v140 = vld [vmem:[%s12 + $0xc] sm:$0xf]
    %v141 = vld [vmem:[%s12 + $0x10] sm:$0xf]
    %v142 = vld [vmem:[%s12 + $0x14] sm:$0xf]
    %v143 = vld [vmem:[%s12 + $0x18] sm:$0xf]
    %v144 = vld [vmem:[%s12 + $0x1c] sm:$0xf]
    %v145 = vld [vmem:[%s12 + $0x20] sm:$0xf]
    %v146 = vld [vmem:[%s12 + $0x24] sm:$0xf]
    %v147 = vld [vmem:[%s12 + $0x28] sm:$0xf]
    %v148 = vld [vmem:[%s12 + $0x2c] sm:$0xf]
    %v149 = vld [vmem:[%s12 + $0x30] sm:$0xf]
    %v150 = vld [vmem:[%s12 + $0x34] sm:$0xf]
    %v151 = vld [vmem:[%s12 + $0x38] sm:$0xf]
    %v152 = vld [vmem:[%s12 + $0x3c] sm:$0xf]
    %v169 = vunpack.c.l.b16 %v137
    %v170 = vunpack.c.l.b16 %v138
    %v171 = vunpack.c.l.b16 %v139
    %v172 = vunpack.c.l.b16 %v140
    %v173 = vunpack.c.l.b16 %v141
    %v174 = vunpack.c.l.b16 %v142
    %v175 = vunpack.c.l.b16 %v143
    %v176 = vunpack.c.l.b16 %v144
    %v177 = vunpack.c.l.b16 %v145
    %v178 = vunpack.c.l.b16 %v146
    %v179 = vunpack.c.l.b16 %v147
    %v180 = vunpack.c.l.b16 %v148
    %v181 = vunpack.c.l.b16 %v149
    %v182 = vunpack.c.l.b16 %v150
    %v183 = vunpack.c.l.b16 %v151
    %v184 = vunpack.c.l.b16 %v152
    %v185 = vpack.c.b16 %v170, %v169
    %v186 = vpack.c.b16 %v172, %v171
    %v187 = vpack.c.b16 %v174, %v173
    %v188 = vpack.c.b16 %v176, %v175
    %v189 = vpack.c.b16 %v178, %v177
    %v190 = vpack.c.b16 %v180, %v179
    %v191 = vpack.c.b16 %v182, %v181
    %v192 = vpack.c.b16 %v184, %v183
    %201 = vmatpush.bf16.msra.mxu0 %v192
    %202 = vmatpush.bf16.msra.mxu0 %v191
    %203 = vmatpush.bf16.msra.mxu0 %v190
    %204 = vmatpush.bf16.msra.mxu0 %v189
    %205 = vmatpush.bf16.msra.mxu0 %v188
    %206 = vmatpush.bf16.msra.mxu0 %v187
    %207 = vmatpush.bf16.msra.mxu0 %v186
    %208 = vmatpush.bf16.msra.mxu0 %v185
    %209 = vmatmul.bf16.gmra.mxu0 %v136
    %v210 = vpop.f32.mrf.mxu0
    %v211 = vadd.f32 0.0, %v210
    %v212 = vpop.f32.mrf.mxu0
    %213 = vdwg.mxu0
    %v214 = vmul.f32 %v99, %v211
    %v215 = vpack.c.bf16 %v214, %v214
    %v217 = vsel %vm107, %v215, 0
    %219 = vmatpush.bf16.msra.mxu0 0
    %220 = vmatpush.bf16.msra.mxu0 0
    %221 = vmatpush.bf16.msra.mxu0 0
    %222 = vmatpush.bf16.msra.mxu0 0
    %223 = vmatpush.bf16.msra.mxu0 0
    %224 = vmatpush.bf16.msra.mxu0 0
    %225 = vmatpush.bf16.msra.mxu0 0
    %226 = vmatpush.bf16.msra.mxu0 %v217
    %227 = vmatmul.bf16.gmra.mxu0 %v105
    %v228 = vpop.f32.mrf.mxu0
    %v229 = vadd.f32 0.0, %v228
    %v230 = vpop.f32.mrf.mxu0
    %231 = vdwg.mxu0
    %v232 = vmul.f32 %v127, %v229
    %v233 = vld [vmem:[%s13] sm:$0x1]
    %v235 = vperm.slane %v233, 0
    %v237 = vadd.f32 %v232, %v235
    %v238 = vmax.f32 %v237, 0.0
    %v239 = vld [vmem:[%s2] sm:$0x1]
    %v241 = vsel %vm103, %v239, 0
    %243 = vmatpush.msra.mxu0 0.0
    %244 = vmatpush.msra.mxu0 0.0
    %245 = vmatpush.msra.mxu0 0.0
    %246 = vmatpush.msra.mxu0 0.0
    %247 = vmatpush.msra.mxu0 0.0
    %248 = vmatpush.msra.mxu0 0.0
    %249 = vmatpush.msra.mxu0 0.0
    %250 = vmatpush.msra.mxu0 0.0
    %251 = vmatpush.msra.mxu0 0.0
    %252 = vmatpush.msra.mxu0 0.0
    %253 = vmatpush.msra.mxu0 0.0
    %254 = vmatpush.msra.mxu0 0.0
    %255 = vmatpush.msra.mxu0 0.0
    %256 = vmatpush.msra.mxu0 0.0
    %257 = vmatpush.msra.mxu0 0.0
    %258 = vmatpush.msra.mxu0 %v238
    %259 = vmatmul.f32.gmra.mxu0 %v241
    %v260 = vpop.f32.mrf.mxu0
    %v261 = vadd.f32 0.0, %v260
    %262 = vdwg.mxu0
    %v263 = vld [vmem:[%s5] sm:$0xf]
    %v264 = vld [vmem:[%s8] sm:$0xff]
    %v265 = vld [vmem:[%s9] sm:$0xff]
    %v266 = vld [vmem:[%s6] sm:$0xf]
    %v268 = vsel %vm79, %v266, 0
    %270 = vmatpush.bf16.msra.mxu0 0
    %271 = vmatpush.bf16.msra.mxu0 0
    %272 = vmatpush.bf16.msra.mxu0 0
    %273 = vmatpush.bf16.msra.mxu0 0
    %274 = vmatpush.bf16.msra.mxu0 0
    %275 = vmatpush.bf16.msra.mxu0 0
    %276 = vmatpush.bf16.msra.mxu0 0
    %277 = vmatpush.bf16.msra.mxu0 %v77
    %278 = vmatmul.bf16.gmra.mxu0 %v268
    %v279 = vpop.f32.mrf.mxu0
    %v280 = vadd.f32 0.0, %v279
    %v281 = vpop.f32.mrf.mxu0
    %282 = vdwg.mxu0
    %284 = vset.pattern.permute.xlu0 0
    %285 = vperm.xlu0 %284, %v265
    %v286 = vpop.permute.xlu0 %285
    %v288 = vmul.f32 %v286, %v280
    %v289 = vpack.c.bf16 %v288, %v288
    %v291 = vsel %vm103, %v263, 0
    %v294 = vsel %vm107, %v289, 0
    %296 = vmatpush.bf16.msra.mxu0 0
    %297 = vmatpush.bf16.msra.mxu0 0
    %298 = vmatpush.bf16.msra.mxu0 0
    %299 = vmatpush.bf16.msra.mxu0 0
    %300 = vmatpush.bf16.msra.mxu0 0
    %301 = vmatpush.bf16.msra.mxu0 0
    %302 = vmatpush.bf16.msra.mxu0 0
    %303 = vmatpush.bf16.msra.mxu0 %v294
    %304 = vmatmul.bf16.gmra.mxu0 %v291
    %v305 = vpop.f32.mrf.mxu0
    %v306 = vadd.f32 0.0, %v305
    %v307 = vpop.f32.mrf.mxu0
    %308 = vdwg.mxu0
    %310 = vset.pattern.permute.xlu0 0
    %311 = vperm.xlu0 %310, %v264
    %v312 = vpop.permute.xlu0 %311
    %v314 = vmul.f32 %v312, %v306
    %v315 = vadd.f32 %v314, %v132
    %v316 = vmax.f32 %v315, 0.0
    %v317 = vpack.c.bf16 %v316, %v316
    %318 = vmatpush.bf16.msra.mxu0 %v192
    %319 = vmatpush.bf16.msra.mxu0 %v191
    %320 = vmatpush.bf16.msra.mxu0 %v190
    %321 = vmatpush.bf16.msra.mxu0 %v189
    %322 = vmatpush.bf16.msra.mxu0 %v188
    %323 = vmatpush.bf16.msra.mxu0 %v187
    %324 = vmatpush.bf16.msra.mxu0 %v186
    %325 = vmatpush.bf16.msra.mxu0 %v185
    %326 = vmatmul.bf16.gmra.mxu0 %v317
    %v327 = vpop.f32.mrf.mxu0
    %v328 = vadd.f32 0.0, %v327
    %v329 = vpop.f32.mrf.mxu0
    %330 = vdwg.mxu0
    %v331 = vmul.f32 %v286, %v328
    %v332 = vpack.c.bf16 %v331, %v331
    %v334 = vsel %vm107, %v332, 0
    %336 = vmatpush.bf16.msra.mxu0 0
    %337 = vmatpush.bf16.msra.mxu0 0
    %338 = vmatpush.bf16.msra.mxu0 0
    %339 = vmatpush.bf16.msra.mxu0 0
    %340 = vmatpush.bf16.msra.mxu0 0
    %341 = vmatpush.bf16.msra.mxu0 0
    %342 = vmatpush.bf16.msra.mxu0 0
    %343 = vmatpush.bf16.msra.mxu0 %v334
    %344 = vmatmul.bf16.gmra.mxu0 %v291
    %v345 = vpop.f32.mrf.mxu0
    %v346 = vadd.f32 0.0, %v345
    %v347 = vpop.f32.mrf.mxu0
    %348 = vdwg.mxu0
    %v349 = vmul.f32 %v312, %v346
    %v350 = vadd.f32 %v349, %v235
    %v351 = vmax.f32 %v350, 0.0
    %v352 = vld [vmem:[%s7] sm:$0x1]
    %v354 = vsel %vm103, %v352, 0
    %356 = vmatpush.msra.mxu0 0.0
    %357 = vmatpush.msra.mxu0 0.0
    %358 = vmatpush.msra.mxu0 0.0
    %359 = vmatpush.msra.mxu0 0.0
    %360 = vmatpush.msra.mxu0 0.0
    %361 = vmatpush.msra.mxu0 0.0
    %362 = vmatpush.msra.mxu0 0.0
    %363 = vmatpush.msra.mxu0 0.0
    %364 = vmatpush.msra.mxu0 0.0
    %365 = vmatpush.msra.mxu0 0.0
    %366 = vmatpush.msra.mxu0 0.0
    %367 = vmatpush.msra.mxu0 0.0
    %368 = vmatpush.msra.mxu0 0.0
    %369 = vmatpush.msra.mxu0 0.0
    %370 = vmatpush.msra.mxu0 0.0
    %371 = vmatpush.msra.mxu0 %v351
    %372 = vmatmul.f32.gmra.mxu0 %v354
    %v373 = vpop.f32.mrf.mxu0
    %v374 = vadd.f32 0.0, %v373
    %375 = vdwg.mxu0
    %v376 = vmul.f32 %v261, %v374
    %v377 = vpack.c.bf16 %v376, %v376
    %v378 = vld [vmem:[%s14] sm:$0xff]
    %v379 = vld [vmem:[%s14 + $0x8] sm:$0xff]
    %v380 = vld [vmem:[%s14 + $0x10] sm:$0xff]
    %v381 = vld [vmem:[%s14 + $0x18] sm:$0xff]
    %v382 = vld [vmem:[%s14 + $0x20] sm:$0xff]
    %v383 = vld [vmem:[%s14 + $0x28] sm:$0xff]
    %v384 = vld [vmem:[%s14 + $0x30] sm:$0xff]
    %v385 = vld [vmem:[%s14 + $0x38] sm:$0xff]
    %v386 = vld [vmem:[%s14 + $0x40] sm:$0xff]
    %v387 = vld [vmem:[%s14 + $0x48] sm:$0xff]
    %v388 = vld [vmem:[%s14 + $0x50] sm:$0xff]
    %v389 = vld [vmem:[%s14 + $0x58] sm:$0xff]
    %v390 = vld [vmem:[%s14 + $0x60] sm:$0xff]
    %v391 = vld [vmem:[%s14 + $0x68] sm:$0xff]
    %v392 = vld [vmem:[%s14 + $0x70] sm:$0xff]
    %v393 = vld [vmem:[%s14 + $0x78] sm:$0xff]
    %v394 = vld [vmem:[%s14 + $0x80] sm:$0xff]
    %v395 = vld [vmem:[%s14 + $0x88] sm:$0xff]
    %v396 = vld [vmem:[%s14 + $0x90] sm:$0xff]
    %v397 = vld [vmem:[%s14 + $0x98] sm:$0xff]
    %v398 = vld [vmem:[%s14 + $0xa0] sm:$0xff]
    %v399 = vld [vmem:[%s14 + $0xa8] sm:$0xff]
    %v400 = vld [vmem:[%s14 + $0xb0] sm:$0xff]
    %v401 = vld [vmem:[%s14 + $0xb8] sm:$0xff]
    %v402 = vld [vmem:[%s14 + $0xc0] sm:$0xff]
    %v403 = vld [vmem:[%s14 + $0xc8] sm:$0xff]
    %v404 = vld [vmem:[%s14 + $0xd0] sm:$0xff]
    %v405 = vld [vmem:[%s14 + $0xd8] sm:$0xff]
    %v406 = vld [vmem:[%s14 + $0xe0] sm:$0xff]
    %v407 = vld [vmem:[%s14 + $0xe8] sm:$0xff]
    %v408 = vld [vmem:[%s14 + $0xf0] sm:$0xff]
    %v409 = vld [vmem:[%s14 + $0xf8] sm:$0xff]
    %v410 = vld [vmem:[%s15] sm:$0xf]
    %v443 = vunpack.c.l.b16 %v378
    %v444 = vunpack.c.h.b16 %v378
    %v445 = vunpack.c.l.b16 %v379
    %v446 = vunpack.c.h.b16 %v379
    %v447 = vunpack.c.l.b16 %v380
    %v448 = vunpack.c.h.b16 %v380
    %v449 = vunpack.c.l.b16 %v381
    %v450 = vunpack.c.h.b16 %v381
    %v451 = vunpack.c.l.b16 %v382
    %v452 = vunpack.c.h.b16 %v382
    %v453 = vunpack.c.l.b16 %v383
    %v454 = vunpack.c.h.b16 %v383
    %v455 = vunpack.c.l.b16 %v384
    %v456 = vunpack.c.h.b16 %v384
    %v457 = vunpack.c.l.b16 %v385
    %v458 = vunpack.c.h.b16 %v385
    %v459 = vunpack.c.l.b16 %v386
    %v460 = vunpack.c.h.b16 %v386
    %v461 = vunpack.c.l.b16 %v387
    %v462 = vunpack.c.h.b16 %v387
    %v463 = vunpack.c.l.b16 %v388
    %v464 = vunpack.c.h.b16 %v388
    %v465 = vunpack.c.l.b16 %v389
    %v466 = vunpack.c.h.b16 %v389
    %v467 = vunpack.c.l.b16 %v390
    %v468 = vunpack.c.h.b16 %v390
    %v469 = vunpack.c.l.b16 %v391
    %v470 = vunpack.c.h.b16 %v391
    %v471 = vunpack.c.l.b16 %v392
    %v472 = vunpack.c.h.b16 %v392
    %v473 = vunpack.c.l.b16 %v393
    %v474 = vunpack.c.h.b16 %v393
    %v475 = vunpack.c.l.b16 %v394
    %v476 = vunpack.c.h.b16 %v394
    %v477 = vunpack.c.l.b16 %v395
    %v478 = vunpack.c.h.b16 %v395
    %v479 = vunpack.c.l.b16 %v396
    %v480 = vunpack.c.h.b16 %v396
    %v481 = vunpack.c.l.b16 %v397
    %v482 = vunpack.c.h.b16 %v397
    %v483 = vunpack.c.l.b16 %v398
    %v484 = vunpack.c.h.b16 %v398
    %v485 = vunpack.c.l.b16 %v399
    %v486 = vunpack.c.h.b16 %v399
    %v487 = vunpack.c.l.b16 %v400
    %v488 = vunpack.c.h.b16 %v400
    %v489 = vunpack.c.l.b16 %v401
    %v490 = vunpack.c.h.b16 %v401
    %v491 = vunpack.c.l.b16 %v402
    %v492 = vunpack.c.h.b16 %v402
    %v493 = vunpack.c.l.b16 %v403
    %v494 = vunpack.c.h.b16 %v403
    %v495 = vunpack.c.l.b16 %v404
    %v496 = vunpack.c.h.b16 %v404
    %v497 = vunpack.c.l.b16 %v405
    %v498 = vunpack.c.h.b16 %v405
    %v499 = vunpack.c.l.b16 %v406
    %v500 = vunpack.c.h.b16 %v406
    %v501 = vunpack.c.l.b16 %v407
    %v502 = vunpack.c.h.b16 %v407
    %v503 = vunpack.c.l.b16 %v408
    %v504 = vunpack.c.h.b16 %v408
    %v505 = vunpack.c.l.b16 %v409
    %v506 = vunpack.c.h.b16 %v409
    %v507 = vpack.c.b16 %v447, %v443
    %v508 = vpack.c.b16 %v448, %v444
    %v509 = vpack.c.b16 %v449, %v445
    %v510 = vpack.c.b16 %v450, %v446
    %v511 = vpack.c.b16 %v455, %v451
    %v512 = vpack.c.b16 %v456, %v452
    %v513 = vpack.c.b16 %v457, %v453
    %v514 = vpack.c.b16 %v458, %v454
    %v515 = vpack.c.b16 %v463, %v459
    %v516 = vpack.c.b16 %v464, %v460
    %v517 = vpack.c.b16 %v465, %v461
    %v518 = vpack.c.b16 %v466, %v462
    %v519 = vpack.c.b16 %v471, %v467
    %v520 = vpack.c.b16 %v472, %v468
    %v521 = vpack.c.b16 %v473, %v469
    %v522 = vpack.c.b16 %v474, %v470
    %v523 = vpack.c.b16 %v479, %v475
    %v524 = vpack.c.b16 %v480, %v476
    %v525 = vpack.c.b16 %v481, %v477
    %v526 = vpack.c.b16 %v482, %v478
    %v527 = vpack.c.b16 %v487, %v483
    %v528 = vpack.c.b16 %v488, %v484
    %v529 = vpack.c.b16 %v489, %v485
    %v530 = vpack.c.b16 %v490, %v486
    %v531 = vpack.c.b16 %v495, %v491
    %v532 = vpack.c.b16 %v496, %v492
    %v533 = vpack.c.b16 %v497, %v493
    %v534 = vpack.c.b16 %v498, %v494
    %v535 = vpack.c.b16 %v503, %v499
    %v536 = vpack.c.b16 %v504, %v500
    %v537 = vpack.c.b16 %v505, %v501
    %v538 = vpack.c.b16 %v506, %v502
    %v572 = vperm.slane %v410, 0
    %v573 = vperm.slane %v410, 1
    %v574 = vperm.slane %v410, 2
    %v575 = vperm.slane %v410, 3
    %580 = vmatpush.bf16.msra.mxu0 %v535
    %581 = vmatpush.bf16.msra.mxu0 %v531
    %582 = vmatpush.bf16.msra.mxu0 %v527
    %583 = vmatpush.bf16.msra.mxu0 %v523
    %584 = vmatpush.bf16.msra.mxu0 %v519
    %585 = vmatpush.bf16.msra.mxu0 %v515
    %586 = vmatpush.bf16.msra.mxu0 %v511
    %587 = vmatpush.bf16.msra.mxu0 %v507
    %588 = vmatmul.bf16.gmra.mxu0 %v377
    %v589 = vpop.f32.mrf.mxu0
    %v590 = vadd.f32 %v572, %v589
    %v591 = vpop.f32.mrf.mxu0
    %592 = vdwg.mxu0
    %593 = vmatpush.bf16.msra.mxu0 %v536
    %594 = vmatpush.bf16.msra.mxu0 %v532
    %595 = vmatpush.bf16.msra.mxu0 %v528
    %596 = vmatpush.bf16.msra.mxu0 %v524
    %597 = vmatpush.bf16.msra.mxu0 %v520
    %598 = vmatpush.bf16.msra.mxu0 %v516
    %599 = vmatpush.bf16.msra.mxu0 %v512
    %600 = vmatpush.bf16.msra.mxu0 %v508
    %601 = vmatmul.bf16.gmra.mxu0 %v377
    %v602 = vpop.f32.mrf.mxu0
    %v603 = vadd.f32 %v573, %v602
    %v604 = vpop.f32.mrf.mxu0
    %605 = vdwg.mxu0
    %606 = vmatpush.bf16.msra.mxu0 %v537
    %607 = vmatpush.bf16.msra.mxu0 %v533
    %608 = vmatpush.bf16.msra.mxu0 %v529
    %609 = vmatpush.bf16.msra.mxu0 %v525
    %610 = vmatpush.bf16.msra.mxu0 %v521
    %611 = vmatpush.bf16.msra.mxu0 %v517
    %612 = vmatpush.bf16.msra.mxu0 %v513
    %613 = vmatpush.bf16.msra.mxu0 %v509
    %614 = vmatmul.bf16.gmra.mxu0 %v377
    %v615 = vpop.f32.mrf.mxu0
    %v616 = vadd.f32 %v574, %v615
    %v617 = vpop.f32.mrf.mxu0
    %618 = vdwg.mxu0
    %619 = vmatpush.bf16.msra.mxu0 %v538
    %620 = vmatpush.bf16.msra.mxu0 %v534
    %621 = vmatpush.bf16.msra.mxu0 %v530
    %622 = vmatpush.bf16.msra.mxu0 %v526
    %623 = vmatpush.bf16.msra.mxu0 %v522
    %624 = vmatpush.bf16.msra.mxu0 %v518
    %625 = vmatpush.bf16.msra.mxu0 %v514
    %626 = vmatpush.bf16.msra.mxu0 %v510
    %627 = vmatmul.bf16.gmra.mxu0 %v377
    %v628 = vpop.f32.mrf.mxu0
    %v629 = vadd.f32 %v575, %v628
    %v630 = vpop.f32.mrf.mxu0
    %631 = vdwg.mxu0
    %v632 = vpack.c.bf16 %v590, %v590
    %v633 = vpack.c.bf16 %v603, %v603
    %v634 = vpack.c.bf16 %v616, %v616
    %v635 = vpack.c.bf16 %v629, %v629
    %v636 = vld [vmem:[%s16] sm:$0xf]
    %v637 = vld [vmem:[%s16 + $0x4] sm:$0xf]
    %v638 = vld [vmem:[%s16 + $0x8] sm:$0xf]
    %v639 = vld [vmem:[%s16 + $0xc] sm:$0xf]
    %v640 = vld [vmem:[%s16 + $0x10] sm:$0xf]
    %v641 = vld [vmem:[%s16 + $0x14] sm:$0xf]
    %v642 = vld [vmem:[%s16 + $0x18] sm:$0xf]
    %v643 = vld [vmem:[%s16 + $0x1c] sm:$0xf]
    %v644 = vld [vmem:[%s16 + $0x20] sm:$0xf]
    %v645 = vld [vmem:[%s16 + $0x24] sm:$0xf]
    %v646 = vld [vmem:[%s16 + $0x28] sm:$0xf]
    %v647 = vld [vmem:[%s16 + $0x2c] sm:$0xf]
    %v648 = vld [vmem:[%s16 + $0x30] sm:$0xf]
    %v649 = vld [vmem:[%s16 + $0x34] sm:$0xf]
    %v650 = vld [vmem:[%s16 + $0x38] sm:$0xf]
    %v651 = vld [vmem:[%s16 + $0x3c] sm:$0xf]
    %v652 = vld [vmem:[%s16 + $0x40] sm:$0xf]
    %v653 = vld [vmem:[%s16 + $0x44] sm:$0xf]
    %v654 = vld [vmem:[%s16 + $0x48] sm:$0xf]
    %v655 = vld [vmem:[%s16 + $0x4c] sm:$0xf]
    %v656 = vld [vmem:[%s16 + $0x50] sm:$0xf]
    %v657 = vld [vmem:[%s16 + $0x54] sm:$0xf]
    %v658 = vld [vmem:[%s16 + $0x58] sm:$0xf]
    %v659 = vld [vmem:[%s16 + $0x5c] sm:$0xf]
    %v660 = vld [vmem:[%s16 + $0x60] sm:$0xf]
    %v661 = vld [vmem:[%s16 + $0x64] sm:$0xf]
    %v662 = vld [vmem:[%s16 + $0x68] sm:$0xf]
    %v663 = vld [vmem:[%s16 + $0x6c] sm:$0xf]
    %v664 = vld [vmem:[%s16 + $0x70] sm:$0xf]
    %v665 = vld [vmem:[%s16 + $0x74] sm:$0xf]
    %v666 = vld [vmem:[%s16 + $0x78] sm:$0xf]
    %v667 = vld [vmem:[%s16 + $0x7c] sm:$0xf]
    %v668 = vld [vmem:[%s16 + $0x80] sm:$0xf]
    %v669 = vld [vmem:[%s16 + $0x84] sm:$0xf]
    %v670 = vld [vmem:[%s16 + $0x88] sm:$0xf]
    %v671 = vld [vmem:[%s16 + $0x8c] sm:$0xf]
    %v672 = vld [vmem:[%s16 + $0x90] sm:$0xf]
    %v673 = vld [vmem:[%s16 + $0x94] sm:$0xf]
    %v674 = vld [vmem:[%s16 + $0x98] sm:$0xf]
    %v675 = vld [vmem:[%s16 + $0x9c] sm:$0xf]
    %v676 = vld [vmem:[%s16 + $0xa0] sm:$0xf]
    %v677 = vld [vmem:[%s16 + $0xa4] sm:$0xf]
    %v678 = vld [vmem:[%s16 + $0xa8] sm:$0xf]
    %v679 = vld [vmem:[%s16 + $0xac] sm:$0xf]
    %v680 = vld [vmem:[%s16 + $0xb0] sm:$0xf]
    %v681 = vld [vmem:[%s16 + $0xb4] sm:$0xf]
    %v682 = vld [vmem:[%s16 + $0xb8] sm:$0xf]
    %v683 = vld [vmem:[%s16 + $0xbc] sm:$0xf]
    %v684 = vld [vmem:[%s16 + $0xc0] sm:$0xf]
    %v685 = vld [vmem:[%s16 + $0xc4] sm:$0xf]
    %v686 = vld [vmem:[%s16 + $0xc8] sm:$0xf]
    %v687 = vld [vmem:[%s16 + $0xcc] sm:$0xf]
    %v688 = vld [vmem:[%s16 + $0xd0] sm:$0xf]
    %v689 = vld [vmem:[%s16 + $0xd4] sm:$0xf]
    %v690 = vld [vmem:[%s16 + $0xd8] sm:$0xf]
    %v691 = vld [vmem:[%s16 + $0xdc] sm:$0xf]
    %v692 = vld [vmem:[%s16 + $0xe0] sm:$0xf]
    %v693 = vld [vmem:[%s16 + $0xe4] sm:$0xf]
    %v694 = vld [vmem:[%s16 + $0xe8] sm:$0xf]
    %v695 = vld [vmem:[%s16 + $0xec] sm:$0xf]
    %v696 = vld [vmem:[%s16 + $0xf0] sm:$0xf]
    %v697 = vld [vmem:[%s16 + $0xf4] sm:$0xf]
    %v698 = vld [vmem:[%s16 + $0xf8] sm:$0xf]
    %v699 = vld [vmem:[%s16 + $0xfc] sm:$0xf]
    %v700 = vld [vmem:[%s17] sm:$0x1]
    %v765 = vunpack.c.l.b16 %v636
    %v766 = vunpack.c.l.b16 %v637
    %v767 = vunpack.c.l.b16 %v638
    %v768 = vunpack.c.l.b16 %v639
    %v769 = vunpack.c.l.b16 %v640
    %v770 = vunpack.c.l.b16 %v641
    %v771 = vunpack.c.l.b16 %v642
    %v772 = vunpack.c.l.b16 %v643
    %v773 = vunpack.c.l.b16 %v644
    %v774 = vunpack.c.l.b16 %v645
    %v775 = vunpack.c.l.b16 %v646
    %v776 = vunpack.c.l.b16 %v647
    %v777 = vunpack.c.l.b16 %v648
    %v778 = vunpack.c.l.b16 %v649
    %v779 = vunpack.c.l.b16 %v650
    %v780 = vunpack.c.l.b16 %v651
    %v781 = vunpack.c.l.b16 %v652
    %v782 = vunpack.c.l.b16 %v653
    %v783 = vunpack.c.l.b16 %v654
    %v784 = vunpack.c.l.b16 %v655
    %v785 = vunpack.c.l.b16 %v656
    %v786 = vunpack.c.l.b16 %v657
    %v787 = vunpack.c.l.b16 %v658
    %v788 = vunpack.c.l.b16 %v659
    %v789 = vunpack.c.l.b16 %v660
    %v790 = vunpack.c.l.b16 %v661
    %v791 = vunpack.c.l.b16 %v662
    %v792 = vunpack.c.l.b16 %v663
    %v793 = vunpack.c.l.b16 %v664
    %v794 = vunpack.c.l.b16 %v665
    %v795 = vunpack.c.l.b16 %v666
    %v796 = vunpack.c.l.b16 %v667
    %v797 = vunpack.c.l.b16 %v668
    %v798 = vunpack.c.l.b16 %v669
    %v799 = vunpack.c.l.b16 %v670
    %v800 = vunpack.c.l.b16 %v671
    %v801 = vunpack.c.l.b16 %v672
    %v802 = vunpack.c.l.b16 %v673
    %v803 = vunpack.c.l.b16 %v674
    %v804 = vunpack.c.l.b16 %v675
    %v805 = vunpack.c.l.b16 %v676
    %v806 = vunpack.c.l.b16 %v677
    %v807 = vunpack.c.l.b16 %v678
    %v808 = vunpack.c.l.b16 %v679
    %v809 = vunpack.c.l.b16 %v680
    %v810 = vunpack.c.l.b16 %v681
    %v811 = vunpack.c.l.b16 %v682
    %v812 = vunpack.c.l.b16 %v683
    %v813 = vunpack.c.l.b16 %v684
    %v814 = vunpack.c.l.b16 %v685
    %v815 = vunpack.c.l.b16 %v686
    %v816 = vunpack.c.l.b16 %v687
    %v817 = vunpack.c.l.b16 %v688
    %v818 = vunpack.c.l.b16 %v689
    %v819 = vunpack.c.l.b16 %v690
    %v820 = vunpack.c.l.b16 %v691
    %v821 = vunpack.c.l.b16 %v692
    %v822 = vunpack.c.l.b16 %v693
    %v823 = vunpack.c.l.b16 %v694
    %v824 = vunpack.c.l.b16 %v695
    %v825 = vunpack.c.l.b16 %v696
    %v826 = vunpack.c.l.b16 %v697
    %v827 = vunpack.c.l.b16 %v698
    %v828 = vunpack.c.l.b16 %v699
    %v829 = vpack.c.b16 %v766, %v765
    %v830 = vpack.c.b16 %v768, %v767
    %v831 = vpack.c.b16 %v770, %v769
    %v832 = vpack.c.b16 %v772, %v771
    %v833 = vpack.c.b16 %v774, %v773
    %v834 = vpack.c.b16 %v776, %v775
    %v835 = vpack.c.b16 %v778, %v777
    %v836 = vpack.c.b16 %v780, %v779
    %v837 = vpack.c.b16 %v782, %v781
    %v838 = vpack.c.b16 %v784, %v783
    %v839 = vpack.c.b16 %v786, %v785
    %v840 = vpack.c.b16 %v788, %v787
    %v841 = vpack.c.b16 %v790, %v789
    %v842 = vpack.c.b16 %v792, %v791
    %v843 = vpack.c.b16 %v794, %v793
    %v844 = vpack.c.b16 %v796, %v795
    %v845 = vpack.c.b16 %v798, %v797
    %v846 = vpack.c.b16 %v800, %v799
    %v847 = vpack.c.b16 %v802, %v801
    %v848 = vpack.c.b16 %v804, %v803
    %v849 = vpack.c.b16 %v806, %v805
    %v850 = vpack.c.b16 %v808, %v807
    %v851 = vpack.c.b16 %v810, %v809
    %v852 = vpack.c.b16 %v812, %v811
    %v853 = vpack.c.b16 %v814, %v813
    %v854 = vpack.c.b16 %v816, %v815
    %v855 = vpack.c.b16 %v818, %v817
    %v856 = vpack.c.b16 %v820, %v819
    %v857 = vpack.c.b16 %v822, %v821
    %v858 = vpack.c.b16 %v824, %v823
    %v859 = vpack.c.b16 %v826, %v825
    %v860 = vpack.c.b16 %v828, %v827
    %893 = vmatpush.bf16.msra.mxu0 %v836
    %894 = vmatpush.bf16.msra.mxu0 %v835
    %895 = vmatpush.bf16.msra.mxu0 %v834
    %896 = vmatpush.bf16.msra.mxu0 %v833
    %897 = vmatpush.bf16.msra.mxu0 %v832
    %898 = vmatpush.bf16.msra.mxu0 %v831
    %899 = vmatpush.bf16.msra.mxu0 %v830
    %900 = vmatpush.bf16.msra.mxu0 %v829
    %901 = vmatmul.bf16.gmra.mxu0 %v632
    %v902 = vpop.f32.mrf.mxu0
    %v903 = vadd.f32 %v700, %v902
    %v904 = vpop.f32.mrf.mxu0
    %905 = vdwg.mxu0
    %906 = vmatpush.bf16.msra.mxu0 %v844
    %907 = vmatpush.bf16.msra.mxu0 %v843
    %908 = vmatpush.bf16.msra.mxu0 %v842
    %909 = vmatpush.bf16.msra.mxu0 %v841
    %910 = vmatpush.bf16.msra.mxu0 %v840
    %911 = vmatpush.bf16.msra.mxu0 %v839
    %912 = vmatpush.bf16.msra.mxu0 %v838
    %913 = vmatpush.bf16.msra.mxu0 %v837
    %914 = vmatmul.bf16.gmra.mxu0 %v633
    %v915 = vpop.f32.mrf.mxu0
    %v916 = vadd.f32 %v903, %v915
    %v917 = vpop.f32.mrf.mxu0
    %918 = vdwg.mxu0
    %919 = vmatpush.bf16.msra.mxu0 %v852
    %920 = vmatpush.bf16.msra.mxu0 %v851
    %921 = vmatpush.bf16.msra.mxu0 %v850
    %922 = vmatpush.bf16.msra.mxu0 %v849
    %923 = vmatpush.bf16.msra.mxu0 %v848
    %924 = vmatpush.bf16.msra.mxu0 %v847
    %925 = vmatpush.bf16.msra.mxu0 %v846
    %926 = vmatpush.bf16.msra.mxu0 %v845
    %927 = vmatmul.bf16.gmra.mxu0 %v634
    %v928 = vpop.f32.mrf.mxu0
    %v929 = vadd.f32 %v916, %v928
    %v930 = vpop.f32.mrf.mxu0
    %931 = vdwg.mxu0
    %932 = vmatpush.bf16.msra.mxu0 %v860
    %933 = vmatpush.bf16.msra.mxu0 %v859
    %934 = vmatpush.bf16.msra.mxu0 %v858
    %935 = vmatpush.bf16.msra.mxu0 %v857
    %936 = vmatpush.bf16.msra.mxu0 %v856
    %937 = vmatpush.bf16.msra.mxu0 %v855
    %938 = vmatpush.bf16.msra.mxu0 %v854
    %939 = vmatpush.bf16.msra.mxu0 %v853
    %940 = vmatmul.bf16.gmra.mxu0 %v635
    %v941 = vpop.f32.mrf.mxu0
    %v942 = vadd.f32 %v929, %v941
    %v943 = vpop.f32.mrf.mxu0
    %944 = vdwg.mxu0
    %v945 = vpack.c.bf16 %v942, %v942
    %v946 = vld [vmem:[%s18] sm:$0xf]
    %v947 = vld [vmem:[%s18 + $0x4] sm:$0xf]
    %v948 = vld [vmem:[%s18 + $0x8] sm:$0xf]
    %v949 = vld [vmem:[%s18 + $0xc] sm:$0xf]
    %v950 = vld [vmem:[%s18 + $0x10] sm:$0xf]
    %v951 = vld [vmem:[%s18 + $0x14] sm:$0xf]
    %v952 = vld [vmem:[%s18 + $0x18] sm:$0xf]
    %v953 = vld [vmem:[%s18 + $0x1c] sm:$0xf]
    %v954 = vld [vmem:[%s18 + $0x20] sm:$0xf]
    %v955 = vld [vmem:[%s18 + $0x24] sm:$0xf]
    %v956 = vld [vmem:[%s18 + $0x28] sm:$0xf]
    %v957 = vld [vmem:[%s18 + $0x2c] sm:$0xf]
    %v958 = vld [vmem:[%s18 + $0x30] sm:$0xf]
    %v959 = vld [vmem:[%s18 + $0x34] sm:$0xf]
    %v960 = vld [vmem:[%s18 + $0x38] sm:$0xf]
    %v961 = vld [vmem:[%s18 + $0x3c] sm:$0xf]
    %v962 = vld [vmem:[%s19] sm:$0x1]
    %v979 = vunpack.c.l.b16 %v946
    %v980 = vunpack.c.l.b16 %v947
    %v981 = vunpack.c.l.b16 %v948
    %v982 = vunpack.c.l.b16 %v949
    %v983 = vunpack.c.l.b16 %v950
    %v984 = vunpack.c.l.b16 %v951
    %v985 = vunpack.c.l.b16 %v952
    %v986 = vunpack.c.l.b16 %v953
    %v987 = vunpack.c.l.b16 %v954
    %v988 = vunpack.c.l.b16 %v955
    %v989 = vunpack.c.l.b16 %v956
    %v990 = vunpack.c.l.b16 %v957
    %v991 = vunpack.c.l.b16 %v958
    %v992 = vunpack.c.l.b16 %v959
    %v993 = vunpack.c.l.b16 %v960
    %v994 = vunpack.c.l.b16 %v961
    %v995 = vpack.c.b16 %v980, %v979
    %v996 = vpack.c.b16 %v982, %v981
    %v997 = vpack.c.b16 %v984, %v983
    %v998 = vpack.c.b16 %v986, %v985
    %v999 = vpack.c.b16 %v988, %v987
    %v1000 = vpack.c.b16 %v990, %v989
    %v1001 = vpack.c.b16 %v992, %v991
    %v1002 = vpack.c.b16 %v994, %v993
    %1011 = vmatpush.bf16.msra.mxu0 %v1002
    %1012 = vmatpush.bf16.msra.mxu0 %v1001
    %1013 = vmatpush.bf16.msra.mxu0 %v1000
    %1014 = vmatpush.bf16.msra.mxu0 %v999
    %1015 = vmatpush.bf16.msra.mxu0 %v998
    %1016 = vmatpush.bf16.msra.mxu0 %v997
    %1017 = vmatpush.bf16.msra.mxu0 %v996
    %1018 = vmatpush.bf16.msra.mxu0 %v995
    %1019 = vmatmul.bf16.gmra.mxu0 %v945
    %v1020 = vpop.f32.mrf.mxu0
    %v1021 = vadd.f32 %v962, %v1020
    %v1022 = vpop.f32.mrf.mxu0
    %1023 = vdwg.mxu0
    %1024 = vst [vmem:[#allocation2] sm:$0x1] %v1021
    // Predicated region
    $region82: #{my_gcn_forward.1} parent=1 // pred_check
      _
    $region83: #{my_gcn_forward.1} parent=1 // pred_check_branch
      %1026 = sbr.rel (0) target = $region85
    $region84: #{my_gcn_forward.1} parent=1 // pred_region
      %1028 = vsyncadd [#allocation3], 0
      %s1030 = sshll.u32 [#allocation2], 4
      %s1031 = int_to_ptr.vmem [resolvable:$true] %s1030
      %s1032 = sshll.u32 %s20, 4
      %s1033 = int_to_ptr.hbm [resolvable:$true] %s1032
      %1035 = dma.vmem_to_hbm [thread:$0]  %s1031, 16, %s1033, [#allocation3]
    $region85: #{my_gcn_forward.1} parent=1 // pred_fallthru
      _
    // Predicated region
    $region86: #{my_gcn_forward.1} parent=1 // pred_check
      _
    $region87: #{my_gcn_forward.1} parent=1 // pred_check_branch
      %1037 = sbr.rel (0) target = $region89
    $region88: #{my_gcn_forward.1} parent=1 // pred_region
      %1039 = dma.done [#allocation3], 16
    $region89: #{my_gcn_forward.1} parent=1 // pred_fallthru
      _
    %1040 = vsyncpa [#allocation3], 1

</llo_original>
